<compile_context>
chip_gen: v5e
topology: v5e:2x2
jax: 0.10.0
libtpu: 0.0.40
codegen_flags: <defaults>
</compile_context>

<pallas_src>
import jax
import jax.numpy as jnp
from jax.experimental import pallas as pl
from jax.experimental.pallas import tpu as pltpu

_LANE = 128  # lane width of a vreg
_SUBLANE = 8


def _round_up(x, m):
    return ((x + m - 1) // m) * m


def _qnet_kernel(x_ref, w1_ref, b1_ref, w2_ref, b2_ref, o_ref):
    # Cast activations to bf16 in VMEM (x arrives as f32; no wrapper copy).
    x = x_ref[...].astype(jnp.bfloat16)
    # Hidden layer: bf16 MXU matmul, f32 accumulation; bias + ReLU in f32.
    h = jnp.dot(x, w1_ref[...], preferred_element_type=jnp.float32)
    h = jnp.maximum(h + b1_ref[...], 0.0)            # b1 [1, hid_p] broadcasts
    # Output layer on the lane-padded (128) weight; accumulate in f32.
    y = jnp.dot(h.astype(w2_ref.dtype), w2_ref[...],
                preferred_element_type=jnp.float32)
    y = y + b2_ref[...]
    # Narrow store: only the real output columns go back to HBM.
    n_out = o_ref.shape[-1]
    o_ref[...] = y[:, :n_out].astype(o_ref.dtype)


def prepare_qnetwork_params(w1, b1, w2, b2):
    """One-time prep: zero-pad (exact math: ReLU(0)=0 and zero rows of w2
    contribute nothing) and cast MXU operands to bf16. Call once per weight
    update, NOT per forward.

    w1: [in, hid]  b1: [hid] or [1, hid]  w2: [hid, out]  b2: [out] or [1, out]
    """
    in_size, hid = w1.shape
    out = w2.shape[1]
    hid_p = _round_up(hid, _LANE)   # 64  -> 128
    out_p = _round_up(out, _LANE)   # 4   -> 128 (MXU lane padding only)

    w1p = jnp.zeros((in_size, hid_p), jnp.bfloat16).at[:, :hid].set(
        w1.astype(jnp.bfloat16))
    b1p = jnp.zeros((1, hid_p), jnp.float32).at[:, :hid].set(
        b1.reshape(1, -1).astype(jnp.float32))
    w2p = jnp.zeros((hid_p, out_p), jnp.bfloat16).at[:hid, :out].set(
        w2.astype(jnp.bfloat16))
    b2p = jnp.zeros((1, out_p), jnp.float32).at[:, :out].set(
        b2.reshape(1, -1).astype(jnp.float32))
    return (w1p, b1p, w2p, b2p, out)


def qnetwork_forward(x, prepared_params, *, batch_tile=2048):
    """Fused QNetwork forward.

    x: [B, in] float32. prepared_params from prepare_qnetwork_params.
    Returns [B, out_features] float32.
    """
    w1p, b1p, w2p, b2p, out_features = prepared_params
    B, in_size = x.shape
    hid_p = w1p.shape[1]
    out_p = w2p.shape[1]

    # Batch tile: multiple of 8 sublanes. For small/medium batches split into
    # >= 2 tiles so both v7x TensorCores get work; for large batches use big
    # tiles to amortize per-step pipeline overhead (VMEM use stays tiny).
    if B <= batch_tile:
        tb = max(_SUBLANE, _round_up(pl.cdiv(B, 2), _SUBLANE))
    else:
        tb = _round_up(batch_tile, _SUBLANE)
    tb = min(tb, _round_up(B, _SUBLANE))
    grid = (pl.cdiv(B, tb),)

    flops = 2 * B * (in_size * hid_p + hid_p * out_p)
    bytes_accessed = (x.size * 4 + w1p.size * 2 + w2p.size * 2
                      + b1p.size * 4 + b2p.size * 4 + B * out_features * 4)

    return pl.pallas_call(
        _qnet_kernel,
        out_shape=jax.ShapeDtypeStruct((B, out_features), jnp.float32),
        grid=grid,
        in_specs=[
            pl.BlockSpec((tb, in_size), lambda i: (i, 0)),      # x: batch-tiled
            pl.BlockSpec((in_size, hid_p), lambda i: (0, 0)),   # w1: resident
            pl.BlockSpec((1, hid_p), lambda i: (0, 0)),         # b1: resident
            pl.BlockSpec((hid_p, out_p), lambda i: (0, 0)),     # w2: resident
            pl.BlockSpec((1, out_p), lambda i: (0, 0)),         # b2: resident
        ],
        out_specs=pl.BlockSpec((tb, out_features), lambda i: (i, 0)),
        compiler_params=pltpu.CompilerParams(
            dimension_semantics=("parallel",)),
        cost_estimate=pl.CostEstimate(
            flops=flops, transcendentals=0, bytes_accessed=bytes_accessed),
    )(x, w1p, b1p, w2p, b2p)


def init_qnetwork_params(key, input_size, output_size, hidden_size=64):
    """Deterministic init mirroring nn.Linear's U(-1/sqrt(fan_in), 1/sqrt(fan_in)).

    Weights are stored transposed relative to PyTorch: [in_features, out_features].
    """
    k1, k2, k3, k4 = jax.random.split(key, 4)
    bound1 = 1.0 / jnp.sqrt(input_size)
    bound2 = 1.0 / jnp.sqrt(hidden_size)
    w1 = jax.random.uniform(k1, (input_size, hidden_size), jnp.float32, -bound1, bound1)
    b1 = jax.random.uniform(k2, (1, hidden_size), jnp.float32, -bound1, bound1)
    w2 = jax.random.uniform(k3, (hidden_size, output_size), jnp.float32, -bound2, bound2)
    b2 = jax.random.uniform(k4, (1, output_size), jnp.float32, -bound2, bound2)
    return w1, b1, w2, b2


if __name__ == "__main__":
    # Small shapes consistent with a DQN Q-network: state dim 8, 4 actions.
    input_size = 8
    output_size = 4
    hidden_size = 64

    key = jax.random.PRNGKey(0)
    kx, kp, kx2 = jax.random.split(key, 3)
    w1, b1, w2, b2 = init_qnetwork_params(kp, input_size, output_size, hidden_size)

    # One-time padding/casting of the parameters (hoisted out of the forward).
    params = prepare_qnetwork_params(w1, b1, w2, b2)

    def f32_ref(x):
        return jnp.maximum(x @ w1 + b1, 0.0) @ w2 + b2

    # 1) Toy batch (single grid step, full-block path).
    x_small = jax.random.normal(kx, (8, input_size), jnp.float32)
    out_small = jax.block_until_ready(qnetwork_forward(x_small, params))
    assert out_small.shape == (8, output_size)
    assert jnp.allclose(out_small, f32_ref(x_small), atol=3e-2, rtol=3e-2)

    # 2) Replay-buffer-sized batch: 2 grid steps (v7x dual-TC) + a partial
    #    last block (exercises masked writeback of the un-padded batch).
    x_big = jax.random.normal(kx2, (1000, input_size), jnp.float32)
    out_big = jax.block_until_ready(qnetwork_forward(x_big, params))
    assert out_big.shape == (1000, output_size)
    assert jnp.allclose(out_big, f32_ref(x_big), atol=3e-2, rtol=3e-2)

    print("KERNEL_OK")
</pallas_src>

<mosaic_0001>
module attributes {stable_mosaic.version = 11 : i64} {
  func.func @_qnet_kernel(%arg0: i32, %arg1: memref<8x8xf32, #tpu.memory_space<vmem>>, %arg2: memref<8x128xbf16, #tpu.memory_space<vmem>>, %arg3: memref<1x128xf32, #tpu.memory_space<vmem>>, %arg4: memref<128x128xbf16, #tpu.memory_space<vmem>>, %arg5: memref<1x128xf32, #tpu.memory_space<vmem>>, %arg6: memref<8x4xf32, #tpu.memory_space<vmem>>) attributes {dimension_semantics = [#tpu.dimension_semantics<parallel>], iteration_bounds = array<i64: 1>, scalar_prefetch = 0 : i64, scratch_operands = 0 : i64, tpu.core_type = #tpu.core_type<tc>, window_params = [{transform_indices = @transform_0, window_bounds = array<i64: 8, 8>}, {pipeline_mode = #tpu.pipeline_mode<synchronous>, transform_indices = @transform_1, window_bounds = array<i64: 8, 128>}, {pipeline_mode = #tpu.pipeline_mode<synchronous>, transform_indices = @transform_2, window_bounds = array<i64: 1, 128>}, {pipeline_mode = #tpu.pipeline_mode<synchronous>, transform_indices = @transform_3, window_bounds = array<i64: 128, 128>}, {pipeline_mode = #tpu.pipeline_mode<synchronous>, transform_indices = @transform_4, window_bounds = array<i64: 1, 128>}, {transform_indices = @transform_5, window_bounds = array<i64: 8, 4>}]} {
    %c0 = arith.constant 0 : index
    %c0_0 = arith.constant 0 : index
    %0 = vector.load %arg1[%c0, %c0_0] : memref<8x8xf32, #tpu.memory_space<vmem>>, vector<8x8xf32>
    %1 = arith.truncf %0 : vector<8x8xf32> to vector<8x8xbf16>
    %c0_1 = arith.constant 0 : index
    %c0_2 = arith.constant 0 : index
    %2 = vector.load %arg2[%c0_1, %c0_2] : memref<8x128xbf16, #tpu.memory_space<vmem>>, vector<8x128xbf16>
    %cst = arith.constant dense<0.000000e+00> : vector<8x128xf32>
    %3 = tpu.matmul %1, %2, %cst {dimension_numbers = #tpu.dot_dimension_numbers<[1], [0], [0], [1], [0, 0, 1, 1], [], []>} : vector<8x8xbf16>, vector<8x128xbf16>, vector<8x128xf32> -> vector<8x128xf32>
    %c0_3 = arith.constant 0 : index
    %c0_4 = arith.constant 0 : index
    %4 = vector.load %arg3[%c0_3, %c0_4] : memref<1x128xf32, #tpu.memory_space<vmem>>, vector<1x128xf32>
    %5 = vector.broadcast %4 : vector<1x128xf32> to vector<8x128xf32>
    %6 = arith.addf %3, %5 : vector<8x128xf32>
    %cst_5 = arith.constant 0.000000e+00 : f32
    %7 = vector.broadcast %cst_5 : f32 to vector<8x128xf32>
    %8 = arith.maximumf %6, %7 : vector<8x128xf32>
    %9 = arith.truncf %8 : vector<8x128xf32> to vector<8x128xbf16>
    %c0_6 = arith.constant 0 : index
    %c0_7 = arith.constant 0 : index
    %10 = vector.load %arg4[%c0_6, %c0_7] : memref<128x128xbf16, #tpu.memory_space<vmem>>, vector<128x128xbf16>
    %cst_8 = arith.constant dense<0.000000e+00> : vector<8x128xf32>
    %11 = tpu.matmul %9, %10, %cst_8 {dimension_numbers = #tpu.dot_dimension_numbers<[1], [0], [0], [1], [0, 0, 1, 1], [], []>} : vector<8x128xbf16>, vector<128x128xbf16>, vector<8x128xf32> -> vector<8x128xf32>
    %c0_9 = arith.constant 0 : index
    %c0_10 = arith.constant 0 : index
    %12 = vector.load %arg5[%c0_9, %c0_10] : memref<1x128xf32, #tpu.memory_space<vmem>>, vector<1x128xf32>
    %13 = vector.broadcast %12 : vector<1x128xf32> to vector<8x128xf32>
    %14 = arith.addf %11, %13 : vector<8x128xf32>
    %15 = vector.extract_strided_slice %14 {offsets = [0, 0], sizes = [8, 4], strides = [1, 1]} : vector<8x128xf32> to vector<8x4xf32>
    %c0_11 = arith.constant 0 : index
    %c0_12 = arith.constant 0 : index
    %16 = vector.load %arg6[%c0_11, %c0_12] : memref<8x4xf32, #tpu.memory_space<vmem>>, vector<8x4xf32>
    tpu.vector_store %arg6[%c0_11, %c0_12], %15 {strides = array<i32>} : memref<8x4xf32, #tpu.memory_space<vmem>>, vector<8x4xf32>,
    return
  }
  func.func @transform_0(%arg0: i32) -> (i32, i32) {
    %c0_i32 = arith.constant 0 : i32
    %c0_i32_0 = arith.constant 0 : i32
    return %arg0, %c0_i32 : i32, i32
  }
  func.func @transform_1(%arg0: i32) -> (i32, i32) {
    %c0_i32 = arith.constant 0 : i32
    %c0_i32_0 = arith.constant 0 : i32
    %c0_i32_1 = arith.constant 0 : i32
    return %c0_i32, %c0_i32_0 : i32, i32
  }
  func.func @transform_2(%arg0: i32) -> (i32, i32) {
    %c0_i32 = arith.constant 0 : i32
    %c0_i32_0 = arith.constant 0 : i32
    %c0_i32_1 = arith.constant 0 : i32
    return %c0_i32, %c0_i32_0 : i32, i32
  }
  func.func @transform_3(%arg0: i32) -> (i32, i32) {
    %c0_i32 = arith.constant 0 : i32
    %c0_i32_0 = arith.constant 0 : i32
    %c0_i32_1 = arith.constant 0 : i32
    return %c0_i32, %c0_i32_0 : i32, i32
  }
  func.func @transform_4(%arg0: i32) -> (i32, i32) {
    %c0_i32 = arith.constant 0 : i32
    %c0_i32_0 = arith.constant 0 : i32
    %c0_i32_1 = arith.constant 0 : i32
    return %c0_i32, %c0_i32_0 : i32, i32
  }
  func.func @transform_5(%arg0: i32) -> (i32, i32) {
    %c0_i32 = arith.constant 0 : i32
    %c0_i32_0 = arith.constant 0 : i32
    return %arg0, %c0_i32 : i32, i32
  }
}

</mosaic_0001>

<llo_original>
// kernel: tpu_custom_call.1
$region0: #{tpu_custom_call.1}
  #allocation0 [shape = 'u32[]', space=smem, size = 0x4, offset = 0x4, fixed_abs, tag = 'smem constant byte address 0x4 - core index']
  #allocation1 [shape = 'u32[72,128]{1,0:T(1,128)}', space=vmem, size = 0x9000, scoped, tag = 'internal scratch']
  %s0 = inlined_call_operand.hbm [shape: f32[8,8], index: 0, kind: input, shape index: {}]
  %s1 = inlined_call_operand.hbm [shape: bf16[8,128], index: 1, kind: input, shape index: {}]
  %s2 = inlined_call_operand.vmem [shape: f32[1,128], index: 2, kind: input, shape index: {}]
  %s3 = inlined_call_operand.hbm [shape: bf16[128,128], index: 3, kind: input, shape index: {}]
  %s4 = inlined_call_operand.vmem [shape: f32[1,128], index: 4, kind: input, shape index: {}]
  %s5 = inlined_call_operand.vmem [shape: f32[8,4], index: 5, kind: output, shape index: {}]
  %s6 = sld [smem:[#allocation0]]
  $region42: #{tpu_custom_call.1} parent=0
    _
  %s8 = ssub.s32 1, %s6
  %s9 = scalar_select 0, %s8, %s6
  $region1: #{tpu_custom_call.1} parent=0
    #allocation2 [shape = 'u8[4096]{0}', space=vmem, size = 0x1000, scoped, tag = 'input window, operand 0, single buffered']
    #allocation3 [shape = 's32[1]{0}', space=sflag, size = 0x4, scoped, tag = 'scoped memory for tpu_custom_call.1']
    #allocation4 [shape = 'u8[2048]{0}', space=vmem, size = 0x800, scoped, tag = 'input window, operand 1, single buffered']
    #allocation5 [shape = 's32[1]{0}', space=sflag, size = 0x4, scoped, tag = 'scoped memory for tpu_custom_call.1']
    #allocation6 [shape = 'u8[32768]{0}', space=vmem, size = 0x8000, scoped, tag = 'input window, operand 3, single buffered']
    %10 = vsyncpa [#allocation3], 0
    %11 = vsyncpa [#allocation5], 0
    // Predicated region
    $region2: #{tpu_custom_call.1} parent=1 // pred_check
      _
    $region3: #{tpu_custom_call.1} parent=1 // pred_check_branch
      %13 = sbr.rel (0) target = $region5
    $region4: #{tpu_custom_call.1} parent=1 // pred_region
      %15 = vsyncadd [#allocation3], 0
      %s17 = sshll.u32 %s0, 4
      %s18 = int_to_ptr.hbm [resolvable:$true] %s17
      %s19 = sshll.u32 [#allocation2], 4
      %s20 = int_to_ptr.vmem [resolvable:$true] %s19
      %22 = dma.hbm_to_vmem [thread:$0]  %s18, 128, %s20, [#allocation3]
    $region5: #{tpu_custom_call.1} parent=1 // pred_fallthru
      _
    // Predicated region
    $region6: #{tpu_custom_call.1} parent=1 // pred_check
      _
    $region7: #{tpu_custom_call.1} parent=1 // pred_check_branch
      %24 = sbr.rel (0) target = $region9
    $region8: #{tpu_custom_call.1} parent=1 // pred_region
      %26 = vsyncadd [#allocation5], 0
      %s28 = sshll.u32 %s1, 4
      %s29 = int_to_ptr.hbm [resolvable:$true] %s28
      %s30 = sshll.u32 [#allocation4], 4
      %s31 = int_to_ptr.vmem [resolvable:$true] %s30
      %33 = dma.hbm_to_vmem [thread:$0]  %s29, 64, %s31, [#allocation5]
    $region9: #{tpu_custom_call.1} parent=1 // pred_fallthru
      _
    // Predicated region
    $region10: #{tpu_custom_call.1} parent=1 // pred_check
      _
    $region11: #{tpu_custom_call.1} parent=1 // pred_check_branch
      %35 = sbr.rel (0) target = $region13
    $region12: #{tpu_custom_call.1} parent=1 // pred_region
      _
    $region13: #{tpu_custom_call.1} parent=1 // pred_fallthru
      _
    // Predicated region
    $region14: #{tpu_custom_call.1} parent=1 // pred_check
      _
    $region15: #{tpu_custom_call.1} parent=1 // pred_check_branch
      %37 = sbr.rel (0) target = $region17
    $region16: #{tpu_custom_call.1} parent=1 // pred_region
      %39 = vsyncadd [#allocation5], 0
      %s40 = sshll.u32 %s3, 4
      %s41 = int_to_ptr.hbm [resolvable:$true] %s40
      %s42 = sshll.u32 [#allocation6], 4
      %s43 = int_to_ptr.vmem [resolvable:$true] %s42
      %48 = dma.hbm_to_vmem [thread:$0]  %s41, 1024, %s43, [#allocation5], 64, 64, 4
    $region17: #{tpu_custom_call.1} parent=1 // pred_fallthru
      _
    // Predicated region
    $region18: #{tpu_custom_call.1} parent=1 // pred_check
      _
    $region19: #{tpu_custom_call.1} parent=1 // pred_check_branch
      %50 = sbr.rel (0) target = $region21
    $region20: #{tpu_custom_call.1} parent=1 // pred_region
      _
    $region21: #{tpu_custom_call.1} parent=1 // pred_fallthru
      _
    // Predicated region
    $region22: #{tpu_custom_call.1} parent=1 // pred_check
      _
    $region23: #{tpu_custom_call.1} parent=1 // pred_check_branch
      %52 = sbr.rel (0) target = $region25
    $region24: #{tpu_custom_call.1} parent=1 // pred_region
      %54 = dma.done [#allocation3], 128
    $region25: #{tpu_custom_call.1} parent=1 // pred_fallthru
      _
    // Predicated region
    $region26: #{tpu_custom_call.1} parent=1 // pred_check
      _
    $region27: #{tpu_custom_call.1} parent=1 // pred_check_branch
      %56 = sbr.rel (0) target = $region29
    $region28: #{tpu_custom_call.1} parent=1 // pred_region
      %58 = dma.done [#allocation5], 64
    $region29: #{tpu_custom_call.1} parent=1 // pred_fallthru
      _
    // Predicated region
    $region30: #{tpu_custom_call.1} parent=1 // pred_check
      _
    $region31: #{tpu_custom_call.1} parent=1 // pred_check_branch
      %60 = sbr.rel (0) target = $region33
    $region32: #{tpu_custom_call.1} parent=1 // pred_region
      %62 = dma.done [#allocation5], 1024
    $region33: #{tpu_custom_call.1} parent=1 // pred_fallthru
      _
    %v64 = vld [vmem:[#allocation2] sm:$0xff]
    %v65 = vpack.c.bf16 %v64, %v64
    %v66 = vld [vmem:[#allocation4] sm:$0xf]
    %v67 = vld [vmem:[%s2] sm:$0x1]
    %v69 = vperm.slane %v67, 0
    %vm71 = vcmask 64512
    %v73 = vsel %vm71, %v65, 0
    %vm75 = vcmask 1043456
    %v77 = vsel %vm75, %v66, 0
    %79 = vmatpush.bf16.msra.mxu0 0
    %80 = vmatpush.bf16.msra.mxu0 0
    %81 = vmatpush.bf16.msra.mxu0 0
    %82 = vmatpush.bf16.msra.mxu0 0
    %83 = vmatpush.bf16.msra.mxu0 0
    %84 = vmatpush.bf16.msra.mxu0 0
    %85 = vmatpush.bf16.msra.mxu0 0
    %86 = vmatpush.bf16.msra.mxu0 %v77
    %87 = vmatmul.bf16.gmra.mxu0 %v73
    %v88 = vpop.f32.mrf.mxu0
    %v89 = vadd.f32 %v69, %v88
    %v90 = vpop.f32.mrf.mxu0
    %91 = vdwg.mxu0
    %v92 = vmax.f32 %v89, 0.0
    %v93 = vpack.c.bf16 %v92, %v92
    %v94 = vld [vmem:[#allocation6] sm:$0xf]
    %v95 = vld [vmem:[#allocation6 + $0x4] sm:$0xf]
    %v96 = vld [vmem:[#allocation6 + $0x8] sm:$0xf]
    %v97 = vld [vmem:[#allocation6 + $0xc] sm:$0xf]
    %v98 = vld [vmem:[#allocation6 + $0x10] sm:$0xf]
    %v99 = vld [vmem:[#allocation6 + $0x14] sm:$0xf]
    %v100 = vld [vmem:[#allocation6 + $0x18] sm:$0xf]
    %v101 = vld [vmem:[#allocation6 + $0x1c] sm:$0xf]
    %v102 = vld [vmem:[#allocation6 + $0x20] sm:$0xf]
    %v103 = vld [vmem:[#allocation6 + $0x24] sm:$0xf]
    %v104 = vld [vmem:[#allocation6 + $0x28] sm:$0xf]
    %v105 = vld [vmem:[#allocation6 + $0x2c] sm:$0xf]
    %v106 = vld [vmem:[#allocation6 + $0x30] sm:$0xf]
    %v107 = vld [vmem:[#allocation6 + $0x34] sm:$0xf]
    %v108 = vld [vmem:[#allocation6 + $0x38] sm:$0xf]
    %v109 = vld [vmem:[#allocation6 + $0x3c] sm:$0xf]
    %v110 = vld [vmem:[%s4] sm:$0x1]
    %v112 = vperm.slane %v110, 0
    %v130 = vunpack.c.l.b16 %v94
    %v131 = vunpack.c.l.b16 %v95
    %v132 = vunpack.c.l.b16 %v96
    %v133 = vunpack.c.l.b16 %v97
    %v134 = vunpack.c.l.b16 %v98
    %v135 = vunpack.c.l.b16 %v99
    %v136 = vunpack.c.l.b16 %v100
    %v137 = vunpack.c.l.b16 %v101
    %v138 = vunpack.c.l.b16 %v102
    %v139 = vunpack.c.l.b16 %v103
    %v140 = vunpack.c.l.b16 %v104
    %v141 = vunpack.c.l.b16 %v105
    %v142 = vunpack.c.l.b16 %v106
    %v143 = vunpack.c.l.b16 %v107
    %v144 = vunpack.c.l.b16 %v108
    %v145 = vunpack.c.l.b16 %v109
    %v146 = vpack.c.b16 %v131, %v130
    %v147 = vpack.c.b16 %v133, %v132
    %v148 = vpack.c.b16 %v135, %v134
    %v149 = vpack.c.b16 %v137, %v136
    %v150 = vpack.c.b16 %v139, %v138
    %v151 = vpack.c.b16 %v141, %v140
    %v152 = vpack.c.b16 %v143, %v142
    %v153 = vpack.c.b16 %v145, %v144
    %162 = vmatpush.bf16.msra.mxu0 %v153
    %163 = vmatpush.bf16.msra.mxu0 %v152
    %164 = vmatpush.bf16.msra.mxu0 %v151
    %165 = vmatpush.bf16.msra.mxu0 %v150
    %166 = vmatpush.bf16.msra.mxu0 %v149
    %167 = vmatpush.bf16.msra.mxu0 %v148
    %168 = vmatpush.bf16.msra.mxu0 %v147
    %169 = vmatpush.bf16.msra.mxu0 %v146
    %170 = vmatmul.bf16.gmra.mxu0 %v93
    %v171 = vpop.f32.mrf.mxu0
    %v172 = vadd.f32 %v112, %v171
    %v173 = vpop.f32.mrf.mxu0
    %174 = vdwg.mxu0
    %vm175 = vcmask 31744
    %176 = vst.msk [vmem:[%s5] sm:$0xff] %vm175, %v172
    // Predicated region
    $region34: #{tpu_custom_call.1} parent=1 // pred_check
      _
    $region35: #{tpu_custom_call.1} parent=1 // pred_check_branch
      %178 = sbr.rel (0) target = $region37
    $region36: #{tpu_custom_call.1} parent=1 // pred_region
      _
    $region37: #{tpu_custom_call.1} parent=1 // pred_fallthru
      _
    // Predicated region
    $region38: #{tpu_custom_call.1} parent=1 // pred_check
      _
    $region39: #{tpu_custom_call.1} parent=1 // pred_check_branch
      %180 = sbr.rel (0) target = $region41
    $region40: #{tpu_custom_call.1} parent=1 // pred_region
      _
    $region41: #{tpu_custom_call.1} parent=1 // pred_fallthru
      _
    %181 = vsyncpa [#allocation3], 1
    %182 = vsyncpa [#allocation5], 1

</llo_original>
